<compile_context>
chip_gen: v7x
topology: tpu7x:2x2x1
jax: 0.10.0
libtpu: 0.0.40
codegen_flags: <defaults>
</compile_context>

<pallas_src>
import functools

import jax
import jax.numpy as jnp
from jax import lax
from jax.experimental import pallas as pl
from jax.experimental.pallas import tpu as pltpu


def _lora_kernel(x_ref, wd_ref, wu_ref, o_ref, *, scale, compute_dtype):
    # x_ref : (tm, in_features)   input rows, original dtype (cast in-kernel)
    # wd_ref: (rank, in_features) down weight, natural lane-dense layout
    # wu_ref: (rank, tn)          up-weight slice (pre-transposed)
    # o_ref : (tm, tn)            output tile, original dtype
    x = x_ref[...].astype(compute_dtype)
    # down = x @ Wd^T  -> (tm, rank); contract the lane (last) dims directly,
    # keeping the down weight lane-dense (no (in, rank) padding to 128 lanes).
    down = lax.dot_general(
        x, wd_ref[...],
        dimension_numbers=(((1,), (1,)), ((), ())),
        preferred_element_type=jnp.float32)
    if scale != 1.0:
        # Apply alpha/rank on the tiny (tm, rank) intermediate.
        down = down * scale
    up = jnp.dot(down.astype(compute_dtype), wu_ref[...],
                 preferred_element_type=jnp.float32)
    o_ref[...] = up.astype(o_ref.dtype)


def _pick_lane_tile(n):
    """Largest lane-dense tile (multiple of 128) dividing n, else full n."""
    if n % 128 != 0:
        return n
    for t in (512, 384, 256, 128):
        if n % t == 0:
            return t
    return n


def lora_linear(hidden_states, down_weight, up_weight, network_alpha=None,
                *, tm=256):
    """Forward of LoRALinearLayer.

    hidden_states: (..., in_features), any float dtype (orig dtype preserved).
    down_weight  : (rank, in_features)   -- as in nn.Linear(in, rank).weight
    up_weight    : (out_features, rank)  -- as in nn.Linear(rank, out).weight
    """
    orig_dtype = hidden_states.dtype
    compute_dtype = down_weight.dtype
    rank, in_features = down_weight.shape
    out_features = up_weight.shape[0]

    lead_shape = hidden_states.shape[:-1]
    x2d = hidden_states.reshape(-1, in_features)   # NO cast here (done in-kernel)
    m = x2d.shape[0]

    x_bytes = jnp.dtype(orig_dtype).itemsize
    w_bytes = jnp.dtype(compute_dtype).itemsize

    tn = _pick_lane_tile(out_features)

    def footprint(tm_):
        # double-buffered x/out tiles + resident (padded) weight tiles.
        fx = tm_ * in_features * x_bytes
        fo = tm_ * max(tn, 128) * x_bytes
        fwd = max(rank, 8) * in_features * w_bytes
        fwu = max(rank, 8) * max(tn, 128) * w_bytes
        return 2 * (fx + fo) + 2 * (fwd + fwu)

    # Sublane alignment: 16 covers f32 (8) and packed bf16 (16) tiles.
    align = 16
    if m <= tm:
        tm = max(align, ((m + align - 1) // align) * align)
    # Shrink tm if the working set would blow past ~48 MiB (safe on v7x's
    # 64 MiB physical VMEM; v5e/v6e have 128 MiB).
    while tm > align and footprint(tm) > 48 * 1024 * 1024:
        tm //= 2

    m_pad = ((m + tm - 1) // tm) * tm
    if m_pad != m:
        x2d = jnp.pad(x2d, ((0, m_pad - m), (0, 0)))

    # Up weight pre-transposed to (rank, out_features): only a 4->8 sublane
    # pad; the lane axis stays dense.  Down weight kept in natural layout.
    wu_t = up_weight.T

    scale = 1.0
    if network_alpha is not None:
        scale = float(network_alpha) / float(rank)

    grid = (m_pad // tm, out_features // tn)

    vmem_limit = int(min(max(32 * 1024 * 1024, 1.25 * footprint(tm)),
                         64 * 1024 * 1024))

    cost = pl.CostEstimate(
        flops=2 * m_pad * rank * (in_features + out_features),
        transcendentals=0,
        bytes_accessed=(m_pad * in_features * x_bytes
                        + m_pad * out_features * x_bytes
                        + rank * (in_features + out_features) * w_bytes))

    out = pl.pallas_call(
        functools.partial(_lora_kernel, scale=scale,
                          compute_dtype=compute_dtype),
        out_shape=jax.ShapeDtypeStruct((m_pad, out_features), orig_dtype),
        grid_spec=pltpu.PrefetchScalarGridSpec(
            num_scalar_prefetch=0,
            grid=grid,
            in_specs=[
                pl.BlockSpec((tm, in_features), lambda i, j: (i, 0)),
                pl.BlockSpec((rank, in_features), lambda i, j: (0, 0)),
                pl.BlockSpec((rank, tn), lambda i, j: (0, j)),
            ],
            out_specs=pl.BlockSpec((tm, tn), lambda i, j: (i, j)),
        ),
        compiler_params=pltpu.CompilerParams(
            dimension_semantics=("parallel", "parallel"),
            vmem_limit_bytes=vmem_limit),
        cost_estimate=cost,
    )(x2d, down_weight, wu_t)

    out = out[:m].reshape(*lead_shape, out_features)
    return out   # already in orig_dtype (cast fused into the kernel)


def init_lora_params(key, in_features, out_features, rank, dtype=jnp.float32):
    """Deterministic init matching the PyTorch module:
    down.weight ~ Normal(0, 1/rank), up.weight = zeros."""
    down_w = (jax.random.normal(key, (rank, in_features), dtype=jnp.float32)
              * (1.0 / rank)).astype(dtype)
    up_w = jnp.zeros((out_features, rank), dtype=dtype)
    return down_w, up_w


if __name__ == "__main__":
    key = jax.random.PRNGKey(0)
    k_x, k_w = jax.random.split(key)

    batch, seq, in_features, out_features, rank = 2, 8, 32, 32, 4
    network_alpha = 8.0

    down_w, up_w = init_lora_params(k_w, in_features, out_features, rank)
    # Up weight is zero-initialized per the module, so LoRA output is exactly
    # zero at init.  Perturb up_w slightly so the kernel math is actually
    # exercised while staying deterministic.
    up_w = up_w + 0.01 * jax.random.normal(
        jax.random.PRNGKey(1), up_w.shape, dtype=up_w.dtype)

    x = jax.random.normal(k_x, (batch, seq, in_features), dtype=jnp.float32)

    out = lora_linear(x, down_w, up_w, network_alpha)
    out = jax.block_until_ready(out)

    # Pure-JAX reference check (matches PyTorch forward semantics).
    ref = ((x.astype(jnp.float32) @ down_w.T) @ up_w.T) * (network_alpha / rank)
    assert out.shape == (batch, seq, out_features)
    assert out.dtype == x.dtype
    assert jnp.allclose(out, ref.astype(out.dtype), atol=1e-5, rtol=1e-5)

    print("KERNEL_OK")
</pallas_src>

<mosaic_0001>
module attributes {stable_mosaic.version = 11 : i64} {
  func.func @_lora_kernel(%arg0: i32, %arg1: i32, %arg2: memref<16x32xf32, #tpu.memory_space<vmem>>, %arg3: memref<4x32xf32, #tpu.memory_space<vmem>>, %arg4: memref<4x32xf32, #tpu.memory_space<vmem>>, %arg5: memref<16x32xf32, #tpu.memory_space<vmem>>) attributes {dimension_semantics = [#tpu.dimension_semantics<parallel>, #tpu.dimension_semantics<parallel>], iteration_bounds = array<i64: 1, 1>, scalar_prefetch = 0 : i64, scratch_operands = 0 : i64, tpu.core_type = #tpu.core_type<tc>, window_params = [{transform_indices = @transform_0, window_bounds = array<i64: 16, 32>}, {pipeline_mode = #tpu.pipeline_mode<synchronous>, transform_indices = @transform_1, window_bounds = array<i64: 4, 32>}, {transform_indices = @transform_2, window_bounds = array<i64: 4, 32>}, {transform_indices = @transform_3, window_bounds = array<i64: 16, 32>}]} {
    %c0 = arith.constant 0 : index
    %c0_0 = arith.constant 0 : index
    %0 = vector.load %arg2[%c0, %c0_0] : memref<16x32xf32, #tpu.memory_space<vmem>>, vector<16x32xf32>
    %c0_1 = arith.constant 0 : index
    %c0_2 = arith.constant 0 : index
    %1 = vector.load %arg3[%c0_1, %c0_2] : memref<4x32xf32, #tpu.memory_space<vmem>>, vector<4x32xf32>
    %cst = arith.constant dense<0.000000e+00> : vector<16x4xf32>
    %2 = tpu.matmul %0, %1, %cst {dimension_numbers = #tpu.dot_dimension_numbers<[1], [1], [0], [0], [0, 0, 1, 0], [], []>} : vector<16x32xf32>, vector<4x32xf32>, vector<16x4xf32> -> vector<16x4xf32>
    %cst_3 = arith.constant 2.000000e+00 : f32
    %3 = vector.broadcast %cst_3 : f32 to vector<16x4xf32>
    %4 = arith.mulf %2, %3 : vector<16x4xf32>
    %c0_4 = arith.constant 0 : index
    %c0_5 = arith.constant 0 : index
    %5 = vector.load %arg4[%c0_4, %c0_5] : memref<4x32xf32, #tpu.memory_space<vmem>>, vector<4x32xf32>
    %cst_6 = arith.constant dense<0.000000e+00> : vector<16x32xf32>
    %6 = tpu.matmul %4, %5, %cst_6 {dimension_numbers = #tpu.dot_dimension_numbers<[1], [0], [0], [1], [0, 0, 1, 1], [], []>} : vector<16x4xf32>, vector<4x32xf32>, vector<16x32xf32> -> vector<16x32xf32>
    %c0_7 = arith.constant 0 : index
    %c0_8 = arith.constant 0 : index
    %7 = vector.load %arg5[%c0_7, %c0_8] : memref<16x32xf32, #tpu.memory_space<vmem>>, vector<16x32xf32>
    tpu.vector_store %arg5[%c0_7, %c0_8], %6 {strides = array<i32>} : memref<16x32xf32, #tpu.memory_space<vmem>>, vector<16x32xf32>,
    return
  }
  func.func @transform_0(%arg0: i32, %arg1: i32) -> (i32, i32) {
    %c0_i32 = arith.constant 0 : i32
    %c0_i32_0 = arith.constant 0 : i32
    return %arg0, %c0_i32 : i32, i32
  }
  func.func @transform_1(%arg0: i32, %arg1: i32) -> (i32, i32) {
    %c0_i32 = arith.constant 0 : i32
    %c0_i32_0 = arith.constant 0 : i32
    %c0_i32_1 = arith.constant 0 : i32
    return %c0_i32, %c0_i32_0 : i32, i32
  }
  func.func @transform_2(%arg0: i32, %arg1: i32) -> (i32, i32) {
    %c0_i32 = arith.constant 0 : i32
    %c0_i32_0 = arith.constant 0 : i32
    return %c0_i32, %arg1 : i32, i32
  }
  func.func @transform_3(%arg0: i32, %arg1: i32) -> (i32, i32) {
    %c0_i32 = arith.constant 0 : i32
    return %arg0, %arg1 : i32, i32
  }
}

</mosaic_0001>

<llo_original>
// kernel: tpu_custom_call.1
$region0: #{tpu_custom_call.1}
  #allocation0 [shape = 'u32[]', space=smem, size = 0x4, offset = 0x4, fixed_abs, tag = 'smem constant byte address 0x4 - core index']
  #allocation1 [shape = 'u32[144,128]{1,0:T(1,128)}', space=vmem, size = 0x12000, scoped, tag = 'internal scratch']
  %s0 = inlined_call_operand.hbm [shape: f32[16,32], index: 0, kind: input, shape index: {}]
  %s1 = inlined_call_operand.hbm [shape: f32[4,32], index: 1, kind: input, shape index: {}]
  %s2 = inlined_call_operand.vmem [shape: f32[4,32], index: 2, kind: input, shape index: {}]
  %s3 = inlined_call_operand.hbm [shape: f32[16,32], index: 3, kind: output, shape index: {}]
  %s4 = sld [smem:[#allocation0]]
  $region30: #{tpu_custom_call.1} parent=0
    _
  %s6 = ssub.s32 1, %s4
  %s7 = scalar_select 0, %s6, %s4
  $region1: #{tpu_custom_call.1} parent=0
    #allocation2 [shape = 'u8[8192]{0}', space=vmem, size = 0x2000, scoped, tag = 'input window, operand 0, single buffered']
    #allocation3 [shape = 's32[1]{0}', space=sflag, size = 0x4, scoped, tag = 'scoped memory for tpu_custom_call.1']
    #allocation4 [shape = 's32[1]{0}', space=sflag, size = 0x4, scoped, tag = 'scoped memory for tpu_custom_call.1']
    #allocation5 [shape = 'u8[2048]{0}', space=vmem, size = 0x800, scoped, tag = 'input window, operand 1, single buffered']
    #allocation6 [shape = 's32[1]{0}', space=sflag, size = 0x4, scoped, tag = 'scoped memory for tpu_custom_call.1']
    #allocation7 [shape = 'u8[8192]{0}', space=vmem, size = 0x2000, scoped, tag = 'output window, operand 0, single buffered']
    %8 = vsyncpa [#allocation3], 0
    %9 = vsyncpa [#allocation6], 0
    %10 = vsyncpa [#allocation4], 0
    // Predicated region
    $region2: #{tpu_custom_call.1} parent=1 // pred_check
      _
    $region3: #{tpu_custom_call.1} parent=1 // pred_check_branch
      %12 = sbr.rel (0) target = $region5
    $region4: #{tpu_custom_call.1} parent=1 // pred_region
      %s14 = ssub.s32 256, 256
      %15 = vsyncadd [#allocation3], %s14
      %s16 = sshll.u32 [#allocation2], 4
      %s17 = int_to_ptr.vmem [resolvable:$true] %s16
      %22 = dma.hbm_to_vmem [thread:$0]  %s0, 256, %s17, [#allocation3], 128, 128, 8
    $region5: #{tpu_custom_call.1} parent=1 // pred_fallthru
      _
    // Predicated region
    $region6: #{tpu_custom_call.1} parent=1 // pred_check
      _
    $region7: #{tpu_custom_call.1} parent=1 // pred_check_branch
      %24 = sbr.rel (0) target = $region9
    $region8: #{tpu_custom_call.1} parent=1 // pred_region
      %s26 = ssub.s32 64, 64
      %27 = vsyncadd [#allocation6], %s26
      %s29 = sshll.u32 [#allocation5], 4
      %s30 = int_to_ptr.vmem [resolvable:$true] %s29
      %32 = dma.hbm_to_vmem [thread:$0]  %s1, 64, %s30, [#allocation6]
    $region9: #{tpu_custom_call.1} parent=1 // pred_fallthru
      _
    // Predicated region
    $region10: #{tpu_custom_call.1} parent=1 // pred_check
      _
    $region11: #{tpu_custom_call.1} parent=1 // pred_check_branch
      %34 = sbr.rel (0) target = $region13
    $region12: #{tpu_custom_call.1} parent=1 // pred_region
      _
    $region13: #{tpu_custom_call.1} parent=1 // pred_fallthru
      _
    // Predicated region
    $region14: #{tpu_custom_call.1} parent=1 // pred_check
      _
    $region15: #{tpu_custom_call.1} parent=1 // pred_check_branch
      %36 = sbr.rel (0) target = $region17
    $region16: #{tpu_custom_call.1} parent=1 // pred_region
      %37 = dma.done [#allocation3], 256
    $region17: #{tpu_custom_call.1} parent=1 // pred_fallthru
      _
    // Predicated region
    $region18: #{tpu_custom_call.1} parent=1 // pred_check
      _
    $region19: #{tpu_custom_call.1} parent=1 // pred_check_branch
      %39 = sbr.rel (0) target = $region21
    $region20: #{tpu_custom_call.1} parent=1 // pred_region
      %40 = dma.done [#allocation6], 64
    $region21: #{tpu_custom_call.1} parent=1 // pred_fallthru
      _
    %v41 = vld [vmem:[#allocation2] sm:$0xff]
    %v42 = vld [vmem:[#allocation2 + $0x8] sm:$0xff]
    %v43 = vld [vmem:[#allocation5] sm:$0xf]
    %vm44 = vcmask 261120
    %v46 = vsel %vm44, %v41, 0
    %v49 = vsel %vm44, %v42, 0
    %v52 = vsel %vm44, %v43, 0
    %54 = vmatprep.subr.mxu0 0.0
    %55 = vmatpush1.xpose.msra.mxu0 %v52
    %56 = vmatprep.subr.mxu0 0.0
    %57 = vmatpush1.xpose.msra.mxu0 0.0
    %58 = vmatprep.subr.mxu0 0.0
    %59 = vmatpush1.xpose.msra.mxu0 0.0
    %60 = vmatprep.subr.mxu0 0.0
    %61 = vmatpush1.xpose.msra.mxu0 0.0
    %62 = vmatprep.subr.mxu0 0.0
    %63 = vmatpush1.xpose.msra.mxu0 0.0
    %64 = vmatprep.subr.mxu0 0.0
    %65 = vmatpush1.xpose.msra.mxu0 0.0
    %66 = vmatprep.subr.mxu0 0.0
    %67 = vmatpush1.xpose.msra.mxu0 0.0
    %68 = vmatprep.subr.mxu0 0.0
    %69 = vmatpush1.xpose.msra.mxu0 0.0
    %70 = vmatprep.subr.mxu0 0.0
    %71 = vmatpush1.xpose.msra.mxu0 0.0
    %72 = vmatprep.subr.mxu0 0.0
    %73 = vmatpush1.xpose.msra.mxu0 0.0
    %74 = vmatprep.subr.mxu0 0.0
    %75 = vmatpush1.xpose.msra.mxu0 0.0
    %76 = vmatprep.subr.mxu0 0.0
    %77 = vmatpush1.xpose.msra.mxu0 0.0
    %78 = vmatprep.subr.mxu0 0.0
    %79 = vmatpush1.xpose.msra.mxu0 0.0
    %80 = vmatprep.subr.mxu0 0.0
    %81 = vmatpush1.xpose.msra.mxu0 0.0
    %82 = vmatprep.subr.mxu0 0.0
    %83 = vmatpush1.xpose.msra.mxu0 0.0
    %84 = vmatprep.subr.mxu0 0.0
    %85 = vmatpush1.xpose.msra.mxu0 0.0
    %86 = vmatprep.subr.mxu0 0.0
    %87 = vmatpush1.xpose.msra.mxu0 0.0
    %88 = vmatprep.subr.mxu0 0.0
    %89 = vmatpush1.xpose.msra.mxu0 0.0
    %90 = vmatprep.subr.mxu0 0.0
    %91 = vmatpush1.xpose.msra.mxu0 0.0
    %92 = vmatprep.subr.mxu0 0.0
    %93 = vmatpush1.xpose.msra.mxu0 0.0
    %94 = vmatprep.subr.mxu0 0.0
    %95 = vmatpush1.xpose.msra.mxu0 0.0
    %96 = vmatprep.subr.mxu0 0.0
    %97 = vmatpush1.xpose.msra.mxu0 0.0
    %98 = vmatprep.subr.mxu0 0.0
    %99 = vmatpush1.xpose.msra.mxu0 0.0
    %100 = vmatprep.subr.mxu0 0.0
    %101 = vmatpush1.xpose.msra.mxu0 0.0
    %102 = vmatprep.subr.mxu0 0.0
    %103 = vmatpush1.xpose.msra.mxu0 0.0
    %104 = vmatprep.subr.mxu0 0.0
    %105 = vmatpush1.xpose.msra.mxu0 0.0
    %106 = vmatprep.subr.mxu0 0.0
    %107 = vmatpush1.xpose.msra.mxu0 0.0
    %108 = vmatprep.subr.mxu0 0.0
    %109 = vmatpush1.xpose.msra.mxu0 0.0
    %110 = vmatprep.subr.mxu0 0.0
    %111 = vmatpush1.xpose.msra.mxu0 0.0
    %112 = vmatprep.subr.mxu0 0.0
    %113 = vmatpush1.xpose.msra.mxu0 0.0
    %114 = vmatprep.subr.mxu0 0.0
    %115 = vmatpush1.xpose.msra.mxu0 0.0
    %116 = vmatprep.subr.mxu0 0.0
    %117 = vmatpush1.xpose.msra.mxu0 0.0
    %118 = vmatprep.mubr.f32.mxu0 0.0
    %119 = vmatmul.mubr.f32.gmra.mrb[0].mxu0 %v46
    %v120 = vpop.f32.mrb[0].mxu0
    %v121 = vadd.f32 0.0, %v120
    %v122 = vpop.f32.mrb[0].mxu0
    %123 = vmatprep.mubr.f32.mxu0 0.0
    %124 = vmatmul.mubr.f32.gmra.mrb[0].mxu0 %v49
    %v125 = vpop.f32.mrb[0].mxu0
    %v126 = vadd.f32 0.0, %v125
    %v127 = vpop.f32.mrb[0].mxu0
    %128 = vdwg.mxu0
    %v129 = vmul.f32 %v121, 2.0
    %v130 = vmul.f32 %v126, 2.0
    %v131 = vld [vmem:[%s2] sm:$0xf]
    %vm132 = vcmask 31744
    %v134 = vsel %vm132, %v129, 0
    %v137 = vsel %vm132, %v130, 0
    %vm139 = vcmask 1043456
    %v141 = vsel %vm139, %v131, 0
    %143 = vmatprep.subr.mxu0 0.0
    %144 = vmatpush1.msra.mxu0 %v141
    %145 = vmatprep.subr.mxu0 0.0
    %146 = vmatpush1.msra.mxu0 0.0
    %147 = vmatprep.subr.mxu0 0.0
    %148 = vmatpush1.msra.mxu0 0.0
    %149 = vmatprep.subr.mxu0 0.0
    %150 = vmatpush1.msra.mxu0 0.0
    %151 = vmatprep.subr.mxu0 0.0
    %152 = vmatpush1.msra.mxu0 0.0
    %153 = vmatprep.subr.mxu0 0.0
    %154 = vmatpush1.msra.mxu0 0.0
    %155 = vmatprep.subr.mxu0 0.0
    %156 = vmatpush1.msra.mxu0 0.0
    %157 = vmatprep.subr.mxu0 0.0
    %158 = vmatpush1.msra.mxu0 0.0
    %159 = vmatprep.subr.mxu0 0.0
    %160 = vmatpush1.msra.mxu0 0.0
    %161 = vmatprep.subr.mxu0 0.0
    %162 = vmatpush1.msra.mxu0 0.0
    %163 = vmatprep.subr.mxu0 0.0
    %164 = vmatpush1.msra.mxu0 0.0
    %165 = vmatprep.subr.mxu0 0.0
    %166 = vmatpush1.msra.mxu0 0.0
    %167 = vmatprep.subr.mxu0 0.0
    %168 = vmatpush1.msra.mxu0 0.0
    %169 = vmatprep.subr.mxu0 0.0
    %170 = vmatpush1.msra.mxu0 0.0
    %171 = vmatprep.subr.mxu0 0.0
    %172 = vmatpush1.msra.mxu0 0.0
    %173 = vmatprep.subr.mxu0 0.0
    %174 = vmatpush1.msra.mxu0 0.0
    %175 = vmatprep.subr.mxu0 0.0
    %176 = vmatpush1.msra.mxu0 0.0
    %177 = vmatprep.subr.mxu0 0.0
    %178 = vmatpush1.msra.mxu0 0.0
    %179 = vmatprep.subr.mxu0 0.0
    %180 = vmatpush1.msra.mxu0 0.0
    %181 = vmatprep.subr.mxu0 0.0
    %182 = vmatpush1.msra.mxu0 0.0
    %183 = vmatprep.subr.mxu0 0.0
    %184 = vmatpush1.msra.mxu0 0.0
    %185 = vmatprep.subr.mxu0 0.0
    %186 = vmatpush1.msra.mxu0 0.0
    %187 = vmatprep.subr.mxu0 0.0
    %188 = vmatpush1.msra.mxu0 0.0
    %189 = vmatprep.subr.mxu0 0.0
    %190 = vmatpush1.msra.mxu0 0.0
    %191 = vmatprep.subr.mxu0 0.0
    %192 = vmatpush1.msra.mxu0 0.0
    %193 = vmatprep.subr.mxu0 0.0
    %194 = vmatpush1.msra.mxu0 0.0
    %195 = vmatprep.subr.mxu0 0.0
    %196 = vmatpush1.msra.mxu0 0.0
    %197 = vmatprep.subr.mxu0 0.0
    %198 = vmatpush1.msra.mxu0 0.0
    %199 = vmatprep.subr.mxu0 0.0
    %200 = vmatpush1.msra.mxu0 0.0
    %201 = vmatprep.subr.mxu0 0.0
    %202 = vmatpush1.msra.mxu0 0.0
    %203 = vmatprep.subr.mxu0 0.0
    %204 = vmatpush1.msra.mxu0 0.0
    %205 = vmatprep.subr.mxu0 0.0
    %206 = vmatpush1.msra.mxu0 0.0
    %207 = vmatprep.mubr.f32.mxu0 0.0
    %208 = vmatmul.mubr.f32.gmra.mrb[0].mxu0 %v134
    %v209 = vpop.f32.mrb[0].mxu0
    %v210 = vadd.f32 0.0, %v209
    %v211 = vpop.f32.mrb[0].mxu0
    %212 = vmatprep.mubr.f32.mxu0 0.0
    %213 = vmatmul.mubr.f32.gmra.mrb[0].mxu0 %v137
    %v214 = vpop.f32.mrb[0].mxu0
    %v215 = vadd.f32 0.0, %v214
    %v216 = vpop.f32.mrb[0].mxu0
    %217 = vdwg.mxu0
    %218 = vst.msk [vmem:[#allocation7] sm:$0xff] %vm44, %v210
    %219 = vst.msk [vmem:[#allocation7 + $0x8] sm:$0xff] %vm44, %v215
    // Predicated region
    $region22: #{tpu_custom_call.1} parent=1 // pred_check
      _
    $region23: #{tpu_custom_call.1} parent=1 // pred_check_branch
      %221 = sbr.rel (0) target = $region25
    $region24: #{tpu_custom_call.1} parent=1 // pred_region
      %s223 = ssub.s32 256, 256
      %224 = vsyncadd [#allocation4], %s223
      %s225 = sshll.u32 [#allocation7], 4
      %s226 = int_to_ptr.vmem [resolvable:$true] %s225
      %231 = dma.vmem_to_hbm [thread:$0]  %s226, 256, %s3, [#allocation4], 128, 128, 8
    $region25: #{tpu_custom_call.1} parent=1 // pred_fallthru
      _
    // Predicated region
    $region26: #{tpu_custom_call.1} parent=1 // pred_check
      _
    $region27: #{tpu_custom_call.1} parent=1 // pred_check_branch
      %233 = sbr.rel (0) target = $region29
    $region28: #{tpu_custom_call.1} parent=1 // pred_region
      %234 = dma.done [#allocation4], 256
    $region29: #{tpu_custom_call.1} parent=1 // pred_fallthru
      _
    %235 = vsyncpa [#allocation3], 1
    %236 = vsyncpa [#allocation6], 1
    %237 = vsyncpa [#allocation4], 1

</llo_original>
